<compile_context>
chip_gen: v5e
topology: v5e:2x2
jax: 0.10.0
libtpu: 0.0.40
codegen_flags: <defaults>
</compile_context>

<pallas_src>
import functools

import jax
import jax.numpy as jnp
from jax import lax
from jax.experimental import pallas as pl
from jax.experimental.pallas import tpu as pltpu


# ----------------------------- Pallas kernel -------------------------------
def _encoder_kernel(xT_ref, w_ref, bn_ref, out_ref, *, n_cols, c_out, eps, slope):
    # xT_ref : (K, 2N)      im2col patches^T, columns [xr-patches | xi-patches]
    # w_ref  : (2*Cout, K)  fused conv weights, rows [conv_re | conv_im]
    # bn_ref : (Cout, 8)    packed BN affine params, cols [Wrr, Wri, Wii, Br, Bi, 0,0,0]
    # out_ref: (2*Cout, N)  rows [yr | yi], channel-major, lane-dense (N = B*OH*OW)
    N = n_cols
    C = c_out

    # ---- fused complex convolution: single MXU pass -------------------------
    g = jnp.dot(w_ref[...], xT_ref[...], preferred_element_type=jnp.float32)  # (2C, 2N)
    rr = g[:C, :N]   # conv_re(xr)
    ri = g[:C, N:]   # conv_re(xi)
    ir = g[C:, :N]   # conv_im(xr)
    ii = g[C:, N:]   # conv_im(xi)
    ar = rr - ii     # real part of the complex conv
    ai = ri + ir     # imaginary part

    # ---- ComplexBatchNorm (training-mode batch statistics) ------------------
    inv_n = 1.0 / N
    mr = jnp.sum(ar, axis=1, keepdims=True) * inv_n
    mi = jnp.sum(ai, axis=1, keepdims=True) * inv_n
    cr = ar - mr
    ci = ai - mi
    vrr = jnp.sum(cr * cr, axis=1, keepdims=True) * inv_n + eps
    vri = jnp.sum(cr * ci, axis=1, keepdims=True) * inv_n
    vii = jnp.sum(ci * ci, axis=1, keepdims=True) * inv_n + eps
    # inverse square root of the per-channel 2x2 covariance matrix
    tau = vrr + vii
    delta = vrr * vii - vri * vri
    s = jnp.sqrt(delta)
    t = jnp.sqrt(tau + 2.0 * s)
    rst = 1.0 / (s * t)
    urr = (s + vii) * rst
    uii = (s + vrr) * rst
    uri = -vri * rst
    # complex affine transform
    bn = bn_ref[...]
    wrr = bn[:, 0:1]
    wri = bn[:, 1:2]
    wii = bn[:, 2:3]
    br = bn[:, 3:4]
    bi = bn[:, 4:5]
    zrr = wrr * urr + wri * uri
    zri = wrr * uri + wri * uii
    zir = wri * urr + wii * uri
    zii = wri * uri + wii * uii
    yr = zrr * cr + zri * ci + br
    yi = zir * cr + zii * ci + bi

    # ---- CLeakyReLU ----------------------------------------------------------
    yr = jnp.where(yr >= 0.0, yr, slope * yr)
    yi = jnp.where(yi >= 0.0, yi, slope * yi)

    out_ref[...] = jnp.concatenate([yr, yi], axis=0)


# ------------------------------ JAX wrapper ---------------------------------
def _im2col_T(x, KH, KW, stride, padding, OH, OW):
    """(B, C, H, W) -> (KH*KW*C, B*OH*OW); row = (kh*KW+kw)*C + c, col = (b*OH+oh)*OW+ow."""
    B, C, _, _ = x.shape
    sh, sw = stride
    ph, pw = padding
    xp = jnp.pad(x, ((0, 0), (0, 0), (ph, ph), (pw, pw)))
    taps = []
    for kh in range(KH):
        for kw in range(KW):
            taps.append(xp[:, :,
                           kh:kh + (OH - 1) * sh + 1:sh,
                           kw:kw + (OW - 1) * sw + 1:sw])    # (B, C, OH, OW)
    pat = jnp.stack(taps, axis=0)             # (KH*KW, B, C, OH, OW)
    pat = pat.transpose(0, 2, 1, 3, 4)        # (KH*KW, C, B, OH, OW)
    return pat.reshape(KH * KW * C, B * OH * OW)


def encoder_forward(xr, xi, params, *, stride, padding, leaky_slope, eps=1e-5):
    w_re = params["conv_re_w"]     # (Cout, Cin, KH, KW)  -- PyTorch Conv2d layout
    w_im = params["conv_im_w"]
    Cout, Cin, KH, KW = w_re.shape
    B, _, H, W = xr.shape
    sh, sw = stride
    ph, pw = padding
    OH = (H + 2 * ph - KH) // sh + 1
    OW = (W + 2 * pw - KW) // sw + 1
    N = B * OH * OW
    K = KH * KW * Cin

    # im2col patches for both components, fused along the column axis: (K, 2N)
    xT = jnp.concatenate(
        [_im2col_T(xr.astype(jnp.float32), KH, KW, stride, padding, OH, OW),
         _im2col_T(xi.astype(jnp.float32), KH, KW, stride, padding, OH, OW)],
        axis=1)

    # fused conv weight matrix (2*Cout, K), column order (kh, kw, cin) matches im2col rows
    def wmat(w):
        return jnp.transpose(w, (0, 2, 3, 1)).reshape(Cout, K)
    w_cat = jnp.concatenate([wmat(w_re), wmat(w_im)], axis=0).astype(jnp.float32)

    # packed BN affine params: (Cout, 8) = [Wrr, Wri, Wii, Br, Bi, 0, 0, 0]
    bn_pack = jnp.zeros((Cout, 8), jnp.float32)
    bn_pack = bn_pack.at[:, 0].set(params["bn_Wrr"])
    bn_pack = bn_pack.at[:, 1].set(params["bn_Wri"])
    bn_pack = bn_pack.at[:, 2].set(params["bn_Wii"])
    bn_pack = bn_pack.at[:, 3].set(params["bn_Br"])
    bn_pack = bn_pack.at[:, 4].set(params["bn_Bi"])

    vmem = pl.BlockSpec(memory_space=pltpu.MemorySpace.VMEM)
    kernel = functools.partial(_encoder_kernel, n_cols=N, c_out=Cout,
                               eps=float(eps), slope=float(leaky_slope))
    out = pl.pallas_call(
        kernel,
        out_shape=jax.ShapeDtypeStruct((2 * Cout, N), jnp.float32),
        in_specs=[vmem, vmem, vmem],
        out_specs=vmem,
    )(xT, w_cat, bn_pack)

    yr = out[:Cout].reshape(Cout, B, OH, OW).transpose(1, 0, 2, 3)
    yi = out[Cout:].reshape(Cout, B, OH, OW).transpose(1, 0, 2, 3)
    return yr, yi


def init_params(key, c_in, c_out, kernel_size):
    """Deterministic synthetic parameters matching the PyTorch module's shapes."""
    kh, kw = kernel_size
    ks = jax.random.split(key, 7)
    return {
        "conv_re_w": 0.1 * jax.random.normal(ks[0], (c_out, c_in, kh, kw), jnp.float32),
        "conv_im_w": 0.1 * jax.random.normal(ks[1], (c_out, c_in, kh, kw), jnp.float32),
        # ComplexBatchNorm affine params (defaults Wrr=Wii=1, Wri=0, plus small noise)
        "bn_Wrr": 1.0 + 0.05 * jax.random.normal(ks[2], (c_out,), jnp.float32),
        "bn_Wri": 0.05 * jax.random.normal(ks[3], (c_out,), jnp.float32),
        "bn_Wii": 1.0 + 0.05 * jax.random.normal(ks[4], (c_out,), jnp.float32),
        "bn_Br": 0.05 * jax.random.normal(ks[5], (c_out,), jnp.float32),
        "bn_Bi": 0.05 * jax.random.normal(ks[6], (c_out,), jnp.float32),
    }


# --------------------------- pure-JAX reference ------------------------------
def ref_forward(xr, xi, params, *, stride, padding, leaky_slope, eps=1e-5):
    ph, pw = padding

    def conv(x, w):
        return lax.conv_general_dilated(
            x, w, window_strides=stride, padding=[(ph, ph), (pw, pw)],
            dimension_numbers=("NCHW", "OIHW", "NCHW"),
            precision=lax.Precision.HIGHEST)

    w_re, w_im = params["conv_re_w"], params["conv_im_w"]
    ar = conv(xr, w_re) - conv(xi, w_im)
    ai = conv(xi, w_re) + conv(xr, w_im)

    red = (0, 2, 3)
    mr = ar.mean(red, keepdims=True)
    mi = ai.mean(red, keepdims=True)
    cr, ci = ar - mr, ai - mi
    vrr = (cr * cr).mean(red, keepdims=True) + eps
    vri = (cr * ci).mean(red, keepdims=True)
    vii = (ci * ci).mean(red, keepdims=True) + eps
    tau = vrr + vii
    delta = vrr * vii - vri * vri
    s = jnp.sqrt(delta)
    t = jnp.sqrt(tau + 2.0 * s)
    rst = 1.0 / (s * t)
    urr, uii, uri = (s + vii) * rst, (s + vrr) * rst, -vri * rst

    view = lambda p: p.reshape(1, -1, 1, 1)
    wrr, wri, wii = view(params["bn_Wrr"]), view(params["bn_Wri"]), view(params["bn_Wii"])
    br, bi = view(params["bn_Br"]), view(params["bn_Bi"])
    zrr = wrr * urr + wri * uri
    zri = wrr * uri + wri * uii
    zir = wri * urr + wii * uri
    zii = wri * uri + wii * uii
    yr = zrr * cr + zri * ci + br
    yi = zir * cr + zii * ci + bi
    yr = jnp.where(yr >= 0.0, yr, leaky_slope * yr)
    yi = jnp.where(yi >= 0.0, yi, leaky_slope * yi)
    return yr, yi


# --------------------------------- main --------------------------------------
if __name__ == "__main__":
    # conv_cfg = (in_channels=4, out_channels=8, kernel=(3,3), stride=(2,2), padding=(1,1))
    B, Cin, H, W = 2, 4, 16, 16
    Cout, ksize, stride, padding = 8, (3, 3), (2, 2), (1, 1)
    leaky_slope = 0.1
    OH = (H + 2 * padding[0] - ksize[0]) // stride[0] + 1
    OW = (W + 2 * padding[1] - ksize[1]) // stride[1] + 1

    key = jax.random.PRNGKey(0)
    kxr, kxi, kp = jax.random.split(key, 3)
    xr = jax.random.normal(kxr, (B, Cin, H, W), jnp.float32)
    xi = jax.random.normal(kxi, (B, Cin, H, W), jnp.float32)
    params = init_params(kp, Cin, Cout, ksize)

    yr, yi = encoder_forward(xr, xi, params, stride=stride, padding=padding,
                             leaky_slope=leaky_slope)
    yr = jax.block_until_ready(yr)
    yi = jax.block_until_ready(yi)

    yr_ref, yi_ref = ref_forward(xr, xi, params, stride=stride, padding=padding,
                                 leaky_slope=leaky_slope)
    assert yr.shape == (B, Cout, OH, OW) and yi.shape == (B, Cout, OH, OW)
    assert jnp.allclose(yr, yr_ref, atol=5e-3, rtol=5e-3), \
        float(jnp.max(jnp.abs(yr - yr_ref)))
    assert jnp.allclose(yi, yi_ref, atol=5e-3, rtol=5e-3), \
        float(jnp.max(jnp.abs(yi - yi_ref)))

    print("KERNEL_OK")
</pallas_src>

<mosaic_0001>
module attributes {stable_mosaic.version = 11 : i64} {
  func.func @_encoder_kernel(%arg0: memref<36x256xf32, #tpu.memory_space<vmem>>, %arg1: memref<16x36xf32, #tpu.memory_space<vmem>>, %arg2: memref<8x8xf32, #tpu.memory_space<vmem>>, %arg3: memref<16x128xf32, #tpu.memory_space<vmem>>) attributes {dimension_semantics = [], scalar_prefetch = 0 : i64, scratch_operands = 0 : i64, tpu.core_type = #tpu.core_type<tc>} {
    %c0 = arith.constant 0 : index
    %c0_0 = arith.constant 0 : index
    %0 = vector.load %arg1[%c0, %c0_0] : memref<16x36xf32, #tpu.memory_space<vmem>>, vector<16x36xf32>
    %c0_1 = arith.constant 0 : index
    %c0_2 = arith.constant 0 : index
    %1 = vector.load %arg0[%c0_1, %c0_2] : memref<36x256xf32, #tpu.memory_space<vmem>>, vector<36x256xf32>
    %cst = arith.constant dense<0.000000e+00> : vector<16x256xf32>
    %2 = tpu.matmul %0, %1, %cst {dimension_numbers = #tpu.dot_dimension_numbers<[1], [0], [0], [1], [0, 0, 1, 1], [], []>} : vector<16x36xf32>, vector<36x256xf32>, vector<16x256xf32> -> vector<16x256xf32>
    %3 = vector.extract_strided_slice %2 {offsets = [0, 0], sizes = [8, 128], strides = [1, 1]} : vector<16x256xf32> to vector<8x128xf32>
    %4 = vector.extract_strided_slice %2 {offsets = [0, 128], sizes = [8, 128], strides = [1, 1]} : vector<16x256xf32> to vector<8x128xf32>
    %5 = vector.extract_strided_slice %2 {offsets = [8, 0], sizes = [8, 128], strides = [1, 1]} : vector<16x256xf32> to vector<8x128xf32>
    %6 = vector.extract_strided_slice %2 {offsets = [8, 128], sizes = [8, 128], strides = [1, 1]} : vector<16x256xf32> to vector<8x128xf32>
    %7 = arith.subf %3, %6 : vector<8x128xf32>
    %8 = arith.addf %4, %5 : vector<8x128xf32>
    %cst_3 = arith.constant dense<0.000000e+00> : vector<8xf32>
    %9 = vector.multi_reduction <add>, %7, %cst_3 [1] : vector<8x128xf32> to vector<8xf32>
    %10 = vector.shape_cast %9 : vector<8xf32> to vector<8x1xf32>
    %cst_4 = arith.constant 7.812500e-03 : f32
    %11 = vector.broadcast %cst_4 : f32 to vector<8x1xf32>
    %12 = arith.mulf %10, %11 : vector<8x1xf32>
    %cst_5 = arith.constant dense<0.000000e+00> : vector<8xf32>
    %13 = vector.multi_reduction <add>, %8, %cst_5 [1] : vector<8x128xf32> to vector<8xf32>
    %14 = vector.shape_cast %13 : vector<8xf32> to vector<8x1xf32>
    %cst_6 = arith.constant 7.812500e-03 : f32
    %15 = vector.broadcast %cst_6 : f32 to vector<8x1xf32>
    %16 = arith.mulf %14, %15 : vector<8x1xf32>
    %17 = vector.broadcast %12 : vector<8x1xf32> to vector<8x128xf32>
    %18 = arith.subf %7, %17 : vector<8x128xf32>
    %19 = vector.broadcast %16 : vector<8x1xf32> to vector<8x128xf32>
    %20 = arith.subf %8, %19 : vector<8x128xf32>
    %21 = arith.mulf %18, %18 : vector<8x128xf32>
    %cst_7 = arith.constant dense<0.000000e+00> : vector<8xf32>
    %22 = vector.multi_reduction <add>, %21, %cst_7 [1] : vector<8x128xf32> to vector<8xf32>
    %23 = vector.shape_cast %22 : vector<8xf32> to vector<8x1xf32>
    %cst_8 = arith.constant 7.812500e-03 : f32
    %24 = vector.broadcast %cst_8 : f32 to vector<8x1xf32>
    %25 = arith.mulf %23, %24 : vector<8x1xf32>
    %cst_9 = arith.constant 9.99999974E-6 : f32
    %26 = vector.broadcast %cst_9 : f32 to vector<8x1xf32>
    %27 = arith.addf %25, %26 : vector<8x1xf32>
    %28 = arith.mulf %18, %20 : vector<8x128xf32>
    %cst_10 = arith.constant dense<0.000000e+00> : vector<8xf32>
    %29 = vector.multi_reduction <add>, %28, %cst_10 [1] : vector<8x128xf32> to vector<8xf32>
    %30 = vector.shape_cast %29 : vector<8xf32> to vector<8x1xf32>
    %cst_11 = arith.constant 7.812500e-03 : f32
    %31 = vector.broadcast %cst_11 : f32 to vector<8x1xf32>
    %32 = arith.mulf %30, %31 : vector<8x1xf32>
    %33 = arith.mulf %20, %20 : vector<8x128xf32>
    %cst_12 = arith.constant dense<0.000000e+00> : vector<8xf32>
    %34 = vector.multi_reduction <add>, %33, %cst_12 [1] : vector<8x128xf32> to vector<8xf32>
    %35 = vector.shape_cast %34 : vector<8xf32> to vector<8x1xf32>
    %cst_13 = arith.constant 7.812500e-03 : f32
    %36 = vector.broadcast %cst_13 : f32 to vector<8x1xf32>
    %37 = arith.mulf %35, %36 : vector<8x1xf32>
    %cst_14 = arith.constant 9.99999974E-6 : f32
    %38 = vector.broadcast %cst_14 : f32 to vector<8x1xf32>
    %39 = arith.addf %37, %38 : vector<8x1xf32>
    %40 = arith.addf %27, %39 : vector<8x1xf32>
    %41 = arith.mulf %27, %39 : vector<8x1xf32>
    %42 = arith.mulf %32, %32 : vector<8x1xf32>
    %43 = arith.subf %41, %42 : vector<8x1xf32>
    %44 = math.sqrt %43 : vector<8x1xf32>
    %cst_15 = arith.constant 2.000000e+00 : f32
    %45 = vector.broadcast %cst_15 : f32 to vector<8x1xf32>
    %46 = arith.mulf %45, %44 : vector<8x1xf32>
    %47 = arith.addf %40, %46 : vector<8x1xf32>
    %48 = math.sqrt %47 : vector<8x1xf32>
    %49 = arith.mulf %44, %48 : vector<8x1xf32>
    %cst_16 = arith.constant 1.000000e+00 : f32
    %50 = vector.broadcast %cst_16 : f32 to vector<8x1xf32>
    %51 = arith.divf %50, %49 : vector<8x1xf32>
    %52 = arith.addf %44, %39 : vector<8x1xf32>
    %53 = arith.mulf %52, %51 : vector<8x1xf32>
    %54 = arith.addf %44, %27 : vector<8x1xf32>
    %55 = arith.mulf %54, %51 : vector<8x1xf32>
    %cst_17 = arith.constant 0.000000e+00 : f32
    %56 = vector.broadcast %cst_17 : f32 to vector<8x1xf32>
    %57 = arith.subf %56, %32 : vector<8x1xf32>
    %58 = arith.mulf %57, %51 : vector<8x1xf32>
    %c0_18 = arith.constant 0 : index
    %c0_19 = arith.constant 0 : index
    %59 = vector.load %arg2[%c0_18, %c0_19] : memref<8x8xf32, #tpu.memory_space<vmem>>, vector<8x8xf32>
    %60 = vector.extract_strided_slice %59 {offsets = [0, 0], sizes = [8, 1], strides = [1, 1]} : vector<8x8xf32> to vector<8x1xf32>
    %61 = vector.extract_strided_slice %59 {offsets = [0, 1], sizes = [8, 1], strides = [1, 1]} : vector<8x8xf32> to vector<8x1xf32>
    %62 = vector.extract_strided_slice %59 {offsets = [0, 2], sizes = [8, 1], strides = [1, 1]} : vector<8x8xf32> to vector<8x1xf32>
    %63 = vector.extract_strided_slice %59 {offsets = [0, 3], sizes = [8, 1], strides = [1, 1]} : vector<8x8xf32> to vector<8x1xf32>
    %64 = vector.extract_strided_slice %59 {offsets = [0, 4], sizes = [8, 1], strides = [1, 1]} : vector<8x8xf32> to vector<8x1xf32>
    %65 = arith.mulf %60, %53 : vector<8x1xf32>
    %66 = arith.mulf %61, %58 : vector<8x1xf32>
    %67 = arith.addf %65, %66 : vector<8x1xf32>
    %68 = arith.mulf %60, %58 : vector<8x1xf32>
    %69 = arith.mulf %61, %55 : vector<8x1xf32>
    %70 = arith.addf %68, %69 : vector<8x1xf32>
    %71 = arith.mulf %61, %53 : vector<8x1xf32>
    %72 = arith.mulf %62, %58 : vector<8x1xf32>
    %73 = arith.addf %71, %72 : vector<8x1xf32>
    %74 = arith.mulf %61, %58 : vector<8x1xf32>
    %75 = arith.mulf %62, %55 : vector<8x1xf32>
    %76 = arith.addf %74, %75 : vector<8x1xf32>
    %77 = vector.broadcast %67 : vector<8x1xf32> to vector<8x128xf32>
    %78 = arith.mulf %77, %18 : vector<8x128xf32>
    %79 = vector.broadcast %70 : vector<8x1xf32> to vector<8x128xf32>
    %80 = arith.mulf %79, %20 : vector<8x128xf32>
    %81 = arith.addf %78, %80 : vector<8x128xf32>
    %82 = vector.broadcast %63 : vector<8x1xf32> to vector<8x128xf32>
    %83 = arith.addf %81, %82 : vector<8x128xf32>
    %84 = vector.broadcast %73 : vector<8x1xf32> to vector<8x128xf32>
    %85 = arith.mulf %84, %18 : vector<8x128xf32>
    %86 = vector.broadcast %76 : vector<8x1xf32> to vector<8x128xf32>
    %87 = arith.mulf %86, %20 : vector<8x128xf32>
    %88 = arith.addf %85, %87 : vector<8x128xf32>
    %89 = vector.broadcast %64 : vector<8x1xf32> to vector<8x128xf32>
    %90 = arith.addf %88, %89 : vector<8x128xf32>
    %cst_20 = arith.constant 0.000000e+00 : f32
    %91 = vector.broadcast %cst_20 : f32 to vector<8x128xf32>
    %92 = arith.cmpf oge, %83, %91 : vector<8x128xf32>
    %cst_21 = arith.constant 1.000000e-01 : f32
    %93 = vector.broadcast %cst_21 : f32 to vector<8x128xf32>
    %94 = arith.mulf %93, %83 : vector<8x128xf32>
    %95 = arith.select %92, %83, %94 : vector<8x128xi1>, vector<8x128xf32>
    %cst_22 = arith.constant 0.000000e+00 : f32
    %96 = vector.broadcast %cst_22 : f32 to vector<8x128xf32>
    %97 = arith.cmpf oge, %90, %96 : vector<8x128xf32>
    %cst_23 = arith.constant 1.000000e-01 : f32
    %98 = vector.broadcast %cst_23 : f32 to vector<8x128xf32>
    %99 = arith.mulf %98, %90 : vector<8x128xf32>
    %100 = arith.select %97, %90, %99 : vector<8x128xi1>, vector<8x128xf32>
    %101 = tpu.concatenate %95, %100 in 0 : vector<8x128xf32>, vector<8x128xf32> -> vector<16x128xf32>
    %c0_24 = arith.constant 0 : index
    %c0_25 = arith.constant 0 : index
    %102 = vector.load %arg3[%c0_24, %c0_25] : memref<16x128xf32, #tpu.memory_space<vmem>>, vector<16x128xf32>
    tpu.vector_store %arg3[%c0_24, %c0_25], %101 {strides = array<i32>} : memref<16x128xf32, #tpu.memory_space<vmem>>, vector<16x128xf32>,
    return
  }
}

</mosaic_0001>

<llo_original>
// kernel: tpu_custom_call.1
$region0: #{tpu_custom_call.1}
  #allocation0 [shape = 'u32[]', space=smem, size = 0x4, offset = 0x4, fixed_abs, tag = 'smem constant byte address 0x4 - core index']
  #allocation1 [shape = 'u32[72,128]{1,0:T(1,128)}', space=vmem, size = 0x9000, scoped, tag = 'internal scratch']
  %s0 = inlined_call_operand.hbm [shape: f32[36,256], index: 0, kind: input, shape index: {}]
  %s1 = inlined_call_operand.hbm [shape: f32[16,36], index: 1, kind: input, shape index: {}]
  %s2 = inlined_call_operand.hbm [shape: f32[8,8], index: 2, kind: input, shape index: {}]
  %s3 = inlined_call_operand.hbm [shape: f32[16,128], index: 3, kind: output, shape index: {}]
  %s4 = sld [smem:[#allocation0]]
  $region34: #{tpu_custom_call.1} parent=0
    _
  %s6 = ssub.s32 1, %s4
  %s7 = scalar_select 0, %s6, %s4
  $region1: #{tpu_custom_call.1} parent=0
    #allocation2 [shape = 'u8[40960]{0}', space=vmem, size = 0xa000, scoped, tag = 'input window, operand 0, single buffered']
    #allocation3 [shape = 's32[1]{0}', space=sflag, size = 0x4, scoped, tag = 'scoped memory for tpu_custom_call.1']
    #allocation4 [shape = 's32[1]{0}', space=sflag, size = 0x4, scoped, tag = 'scoped memory for tpu_custom_call.1']
    #allocation5 [shape = 'u8[8192]{0}', space=vmem, size = 0x2000, scoped, tag = 'input window, operand 1, single buffered']
    #allocation6 [shape = 's32[1]{0}', space=sflag, size = 0x4, scoped, tag = 'scoped memory for tpu_custom_call.1']
    #allocation7 [shape = 'u8[4096]{0}', space=vmem, size = 0x1000, scoped, tag = 'input window, operand 2, single buffered']
    #allocation8 [shape = 'u8[8192]{0}', space=vmem, size = 0x2000, scoped, tag = 'output window, operand 0, single buffered']
    %8 = vsyncpa [#allocation3], 0
    %9 = vsyncpa [#allocation6], 0
    %10 = vsyncpa [#allocation4], 0
    // Predicated region
    $region2: #{tpu_custom_call.1} parent=1 // pred_check
      _
    $region3: #{tpu_custom_call.1} parent=1 // pred_check_branch
      %12 = sbr.rel (0) target = $region5
    $region4: #{tpu_custom_call.1} parent=1 // pred_region
      %14 = vsyncadd [#allocation3], 0
      %s15 = sshll.u32 %s0, 4
      %s16 = int_to_ptr.hbm [resolvable:$true] %s15
      %s17 = sshll.u32 [#allocation2], 4
      %s18 = int_to_ptr.vmem [resolvable:$true] %s17
      %23 = dma.hbm_to_vmem [thread:$0]  %s16, 1280, %s18, [#allocation3], 256, 256, 16
    $region5: #{tpu_custom_call.1} parent=1 // pred_fallthru
      _
    // Predicated region
    $region6: #{tpu_custom_call.1} parent=1 // pred_check
      _
    $region7: #{tpu_custom_call.1} parent=1 // pred_check_branch
      %25 = sbr.rel (0) target = $region9
    $region8: #{tpu_custom_call.1} parent=1 // pred_region
      %27 = vsyncadd [#allocation6], 0
      %s28 = sshll.u32 %s1, 4
      %s29 = int_to_ptr.hbm [resolvable:$true] %s28
      %s30 = sshll.u32 [#allocation5], 4
      %s31 = int_to_ptr.vmem [resolvable:$true] %s30
      %36 = dma.hbm_to_vmem [thread:$0]  %s29, 256, %s31, [#allocation6], 128, 128, 8
    $region9: #{tpu_custom_call.1} parent=1 // pred_fallthru
      _
    // Predicated region
    $region10: #{tpu_custom_call.1} parent=1 // pred_check
      _
    $region11: #{tpu_custom_call.1} parent=1 // pred_check_branch
      %38 = sbr.rel (0) target = $region13
    $region12: #{tpu_custom_call.1} parent=1 // pred_region
      %40 = vsyncadd [#allocation6], 0
      %s42 = sshll.u32 %s2, 4
      %s43 = int_to_ptr.hbm [resolvable:$true] %s42
      %s44 = sshll.u32 [#allocation7], 4
      %s45 = int_to_ptr.vmem [resolvable:$true] %s44
      %47 = dma.hbm_to_vmem [thread:$0]  %s43, 128, %s45, [#allocation6]
    $region13: #{tpu_custom_call.1} parent=1 // pred_fallthru
      _
    // Predicated region
    $region14: #{tpu_custom_call.1} parent=1 // pred_check
      _
    $region15: #{tpu_custom_call.1} parent=1 // pred_check_branch
      %49 = sbr.rel (0) target = $region17
    $region16: #{tpu_custom_call.1} parent=1 // pred_region
      %51 = dma.done [#allocation3], 1280
    $region17: #{tpu_custom_call.1} parent=1 // pred_fallthru
      _
    // Predicated region
    $region18: #{tpu_custom_call.1} parent=1 // pred_check
      _
    $region19: #{tpu_custom_call.1} parent=1 // pred_check_branch
      %53 = sbr.rel (0) target = $region21
    $region20: #{tpu_custom_call.1} parent=1 // pred_region
      %55 = dma.done [#allocation6], 256
    $region21: #{tpu_custom_call.1} parent=1 // pred_fallthru
      _
    // Predicated region
    $region22: #{tpu_custom_call.1} parent=1 // pred_check
      _
    $region23: #{tpu_custom_call.1} parent=1 // pred_check_branch
      %57 = sbr.rel (0) target = $region25
    $region24: #{tpu_custom_call.1} parent=1 // pred_region
      %59 = dma.done [#allocation6], 128
    $region25: #{tpu_custom_call.1} parent=1 // pred_fallthru
      _
    %v60 = vld [vmem:[#allocation5] sm:$0xff]
    %v61 = vld [vmem:[#allocation5 + $0x8] sm:$0xff]
    %v62 = vld [vmem:[#allocation2] sm:$0xff]
    %v63 = vld [vmem:[#allocation2 + $0x8] sm:$0xff]
    %v64 = vld [vmem:[#allocation2 + $0x10] sm:$0xff]
    %v65 = vld [vmem:[#allocation2 + $0x18] sm:$0xff]
    %v66 = vld [vmem:[#allocation2 + $0x20] sm:$0xff]
    %v67 = vld [vmem:[#allocation2 + $0x28] sm:$0xff]
    %v68 = vld [vmem:[#allocation2 + $0x30] sm:$0xff]
    %v69 = vld [vmem:[#allocation2 + $0x38] sm:$0xff]
    %v70 = vld [vmem:[#allocation2 + $0x40] sm:$0xf]
    %v71 = vld [vmem:[#allocation2 + $0x48] sm:$0xf]
    %vm72 = vcmask 293888
    %v74 = vsel %vm72, %v60, 0
    %v77 = vsel %vm72, %v61, 0
    %vm79 = vcmask 1043456
    %v81 = vsel %vm79, %v70, 0
    %v84 = vsel %vm79, %v71, 0
    %86 = vmatpush.msra.mxu0 0.0
    %87 = vmatpush.msra.mxu0 0.0
    %88 = vmatpush.msra.mxu0 0.0
    %89 = vmatpush.msra.mxu0 0.0
    %90 = vmatpush.msra.mxu0 0.0
    %91 = vmatpush.msra.mxu0 0.0
    %92 = vmatpush.msra.mxu0 0.0
    %93 = vmatpush.msra.mxu0 0.0
    %94 = vmatpush.msra.mxu0 0.0
    %95 = vmatpush.msra.mxu0 0.0
    %96 = vmatpush.msra.mxu0 0.0
    %97 = vmatpush.msra.mxu0 %v81
    %98 = vmatpush.msra.mxu0 %v68
    %99 = vmatpush.msra.mxu0 %v66
    %100 = vmatpush.msra.mxu0 %v64
    %101 = vmatpush.msra.mxu0 %v62
    %102 = vmatmul.f32.gmra.mxu0 %v74
    %v103 = vpop.f32.mrf.mxu0
    %v104 = vadd.f32 0.0, %v103
    %105 = vmatmul.f32.gmra.mxu0 %v77
    %v106 = vpop.f32.mrf.mxu0
    %v107 = vadd.f32 0.0, %v106
    %108 = vdwg.mxu0
    %109 = vmatpush.msra.mxu0 0.0
    %110 = vmatpush.msra.mxu0 0.0
    %111 = vmatpush.msra.mxu0 0.0
    %112 = vmatpush.msra.mxu0 0.0
    %113 = vmatpush.msra.mxu0 0.0
    %114 = vmatpush.msra.mxu0 0.0
    %115 = vmatpush.msra.mxu0 0.0
    %116 = vmatpush.msra.mxu0 0.0
    %117 = vmatpush.msra.mxu0 0.0
    %118 = vmatpush.msra.mxu0 0.0
    %119 = vmatpush.msra.mxu0 0.0
    %120 = vmatpush.msra.mxu0 %v84
    %121 = vmatpush.msra.mxu0 %v69
    %122 = vmatpush.msra.mxu0 %v67
    %123 = vmatpush.msra.mxu0 %v65
    %124 = vmatpush.msra.mxu0 %v63
    %125 = vmatmul.f32.gmra.mxu0 %v74
    %v126 = vpop.f32.mrf.mxu0
    %v127 = vadd.f32 0.0, %v126
    %128 = vmatmul.f32.gmra.mxu0 %v77
    %v129 = vpop.f32.mrf.mxu0
    %v130 = vadd.f32 0.0, %v129
    %131 = vdwg.mxu0
    %v132 = vsub.f32 %v104, %v130
    %v133 = vadd.f32 %v127, %v107
    %134 = vadd.xlane.f32.xlu0 %v132
    %v135 = vpop.xlane.xlu0 %134
    %v136 = vmul.f32 %v135, 0.0078125
    %137 = vadd.xlane.f32.xlu0 %v133
    %v138 = vpop.xlane.xlu0 %137
    %v139 = vmul.f32 %v138, 0.0078125
    %v140 = vsub.f32 %v132, %v136
    %v141 = vsub.f32 %v133, %v139
    %v142 = vmul.f32 %v140, %v140
    %143 = vadd.xlane.f32.xlu0 %v142
    %v144 = vpop.xlane.xlu0 %143
    %v145 = vmul.f32 %v144, 0.0078125
    %v146 = vadd.f32 %v145, 1e-05
    %v147 = vmul.f32 %v140, %v141
    %148 = vadd.xlane.f32.xlu0 %v147
    %v149 = vpop.xlane.xlu0 %148
    %v150 = vmul.f32 %v149, 0.0078125
    %v151 = vmul.f32 %v141, %v141
    %152 = vadd.xlane.f32.xlu0 %v151
    %v153 = vpop.xlane.xlu0 %152
    %v154 = vmul.f32 %v153, 0.0078125
    %v155 = vadd.f32 %v154, 1e-05
    %v156 = vadd.f32 %v146, %v155
    %v157 = vmul.f32 %v146, %v155
    %v158 = vmul.f32 %v150, %v150
    %v159 = vsub.f32 %v157, %v158
    %v160 = vrsqrt.pop %v159
    %v161 = vmul.f32 %v160, %v159
    %v162 = vmul.f32 %v161, %v160
    %v163 = vmul.f32 0.5, %v162
    %v164 = vsub.f32 1.5, %v163
    %v165 = vmul.f32 %v160, %v164
    %v166 = vmul.f32 %v159, %v165
    %vm167 = vcmp.eq.f32.partialorder %v159, inf
    %v168 = vsel %vm167, %v159, %v166
    %vm169 = vcmp.eq.f32.partialorder %v159, 0.0
    %v170 = vand.u32 %v159, 2147483648
    %v171 = vsel %vm169, %v170, %v168
    %v172 = vmul.f32 %v171, 2.0
    %v173 = vadd.f32 %v156, %v172
    %v174 = vrsqrt.pop %v173
    %v175 = vmul.f32 %v174, %v173
    %v176 = vmul.f32 %v175, %v174
    %v177 = vmul.f32 0.5, %v176
    %v178 = vsub.f32 1.5, %v177
    %v179 = vmul.f32 %v174, %v178
    %v180 = vmul.f32 %v173, %v179
    %vm181 = vcmp.eq.f32.partialorder %v173, inf
    %v182 = vsel %vm181, %v173, %v180
    %vm183 = vcmp.eq.f32.partialorder %v173, 0.0
    %v184 = vand.u32 %v173, 2147483648
    %v185 = vsel %vm183, %v184, %v182
    %v186 = vmul.f32 %v171, %v185
    %v187 = vrcp.pop %v186
    %v188 = vmul.f32 %v186, %v187
    %v189 = vsub.f32 1.0, %v188
    %v190 = vmul.f32 %v187, %v189
    %v191 = vadd.f32 %v187, %v190
    %vm192 = vweird.f32 %v186
    %vm193 = vweird.f32 %v187
    %vm194 = vmor %vm192, %vm193
    %v195 = vsel %vm194, %v187, %v191
    %v196 = vand.u32 2147483647, %v186
    %vm197 = vcmp.eq.f32.partialorder %v196, 8.507059e+37
    %v198 = vand.u32 %v186, 2147483648
    %v199 = vor.u32 1.1754944e-38, %v198
    %v200 = vsel %vm197, %v199, %v195
    %v201 = vmul.f32 1.0, %v200
    %v202 = vadd.f32 %v171, %v155
    %v203 = vmul.f32 %v202, %v201
    %v204 = vadd.f32 %v171, %v146
    %v205 = vmul.f32 %v204, %v201
    %v206 = vsub.f32 0.0, %v150
    %v207 = vmul.f32 %v206, %v201
    %v208 = vld [vmem:[#allocation7] sm:$0xff]
    %v209 = vmul.f32 %v208, %v203
    %v210 = vmul.f32 %v208, %v207
    %212 = vrot.lane.b32.xlu0 %v210, 127
    %v213 = vpop.permute.xlu0 %212
    %v215 = vadd.f32 %v209, %v213
    %v216 = vmul.f32 %v208, %v205
    %218 = vrot.lane.b32.xlu0 %v216, 127
    %v219 = vpop.permute.xlu0 %218
    %v221 = vadd.f32 %v210, %v219
    %223 = vset.pattern.permute.xlu0 0
    %224 = vperm.xlu0 %223, %v215
    %v225 = vpop.permute.xlu0 %224
    %v227 = vmul.f32 %v225, %v140
    %229 = vset.pattern.permute.xlu0 0
    %230 = vperm.xlu0 %229, %v221
    %v231 = vpop.permute.xlu0 %230
    %v233 = vmul.f32 %v231, %v141
    %v234 = vadd.f32 %v227, %v233
    %236 = vset.pattern.permute.xlu0 3
    %237 = vperm.xlu0 %236, %v208
    %v238 = vpop.permute.xlu0 %237
    %v240 = vadd.f32 %v234, %v238
    %241 = vset.pattern.permute.xlu0 1
    %242 = vperm.xlu0 %241, %v215
    %v243 = vpop.permute.xlu0 %242
    %v245 = vmul.f32 %v243, %v140
    %246 = vset.pattern.permute.xlu0 1
    %247 = vperm.xlu0 %246, %v221
    %v248 = vpop.permute.xlu0 %247
    %v250 = vmul.f32 %v248, %v141
    %v251 = vadd.f32 %v245, %v250
    %252 = vset.pattern.permute.xlu0 4
    %253 = vperm.xlu0 %252, %v208
    %v254 = vpop.permute.xlu0 %253
    %v256 = vadd.f32 %v251, %v254
    %vm257 = vcmp.ge.f32.partialorder %v240, 0.0
    %v258 = vmul.f32 %v240, 0.1
    %v259 = vsel %vm257, %v240, %v258
    %vm260 = vcmp.ge.f32.partialorder %v256, 0.0
    %v261 = vmul.f32 %v256, 0.1
    %v262 = vsel %vm260, %v256, %v261
    %263 = vst [vmem:[#allocation8] sm:$0xff] %v259
    %264 = vst [vmem:[#allocation8 + $0x8] sm:$0xff] %v262
    // Predicated region
    $region26: #{tpu_custom_call.1} parent=1 // pred_check
      _
    $region27: #{tpu_custom_call.1} parent=1 // pred_check_branch
      %266 = sbr.rel (0) target = $region29
    $region28: #{tpu_custom_call.1} parent=1 // pred_region
      %268 = vsyncadd [#allocation4], 0
      %s269 = sshll.u32 [#allocation8], 4
      %s270 = int_to_ptr.vmem [resolvable:$true] %s269
      %s271 = sshll.u32 %s3, 4
      %s272 = int_to_ptr.hbm [resolvable:$true] %s271
      %277 = dma.vmem_to_hbm [thread:$0]  %s270, 256, %s272, [#allocation4], 128, 128, 8
    $region29: #{tpu_custom_call.1} parent=1 // pred_fallthru
      _
    // Predicated region
    $region30: #{tpu_custom_call.1} parent=1 // pred_check
      _
    $region31: #{tpu_custom_call.1} parent=1 // pred_check_branch
      %279 = sbr.rel (0) target = $region33
    $region32: #{tpu_custom_call.1} parent=1 // pred_region
      %281 = dma.done [#allocation4], 256
    $region33: #{tpu_custom_call.1} parent=1 // pred_fallthru
      _
    %282 = vsyncpa [#allocation3], 1
    %283 = vsyncpa [#allocation6], 1
    %284 = vsyncpa [#allocation4], 1

</llo_original>
